<compile_context>
chip_gen: v7x
topology: tpu7x:2x2x1
jax: 0.10.0
libtpu: 0.0.40
codegen_flags: <defaults>
</compile_context>

<pallas_src>
import functools
import math

import jax
import jax.numpy as jnp
from jax.experimental import pallas as pl
from jax.experimental.pallas import tpu as pltpu

_SMOOTH = 1e-05
_OUT_LANES = 128


def _stable_terms(x, t):
    """Shared elementwise math: stable BCE terms and sigmoid from one exp."""
    e = jnp.exp(-jnp.abs(x))                     # exp(-|x|), reused
    bce_el = jnp.maximum(x, 0.0) - x * t + jnp.log1p(e)
    r = pl.reciprocal(1.0 + e, approx=True)      # EUP reciprocal path
    p = jnp.where(x >= 0.0, r, e * r)            # sigmoid(x) without a second exp
    return bce_el, p


def _bce_dice_kernel_packed(x_ref, t_ref, bce_ref, dice_ref):
    """Whole sample(s) per block: block = (B_tile, rows, lanes)."""
    x = x_ref[...].astype(jnp.float32)
    t = t_ref[...].astype(jnp.float32)
    bce_el, p = _stable_terms(x, t)

    # Per-sample reductions (lane reduce then sublane reduce).
    inter = jnp.sum(jnp.sum(p * t, axis=2), axis=1, keepdims=True)      # (B_tile, 1)
    denom = jnp.sum(jnp.sum(p + t, axis=2), axis=1, keepdims=True)      # (B_tile, 1)
    bce_b = jnp.sum(jnp.sum(bce_el, axis=2), axis=1, keepdims=True)     # (B_tile, 1)

    dice = (2.0 * inter + _SMOOTH) / (denom + _SMOOTH)                  # (B_tile, 1)
    bce_s = jnp.sum(bce_b, axis=0, keepdims=True)                       # (1, 1)
    dice_s = jnp.sum(dice, axis=0, keepdims=True)                       # (1, 1)

    bce_ref[...] = jnp.broadcast_to(bce_s, bce_ref.shape).astype(bce_ref.dtype)
    dice_ref[...] = jnp.broadcast_to(dice_s, dice_ref.shape).astype(dice_ref.dtype)


def _bce_dice_kernel_chunked(x_ref, t_ref, bce_ref, dice_ref,
                             acc_bce, acc_pt, acc_ppt, *, nc):
    """One sample per batch block, chunked rows: block = (rows_tile, lanes)."""
    c = pl.program_id(1)

    @pl.when(c == 0)
    def _init():
        acc_bce[...] = jnp.zeros_like(acc_bce)
        acc_pt[...] = jnp.zeros_like(acc_pt)
        acc_ppt[...] = jnp.zeros_like(acc_ppt)

    x = x_ref[...].astype(jnp.float32)          # (rows_tile, lanes)
    t = t_ref[...].astype(jnp.float32)
    bce_el, p = _stable_terms(x, t)

    # Per-lane partial sums (VPU adds across vregs; no cross-lane work on hot loop).
    acc_bce[...] += jnp.sum(bce_el, axis=0, keepdims=True)
    acc_pt[...] += jnp.sum(p * t, axis=0, keepdims=True)
    acc_ppt[...] += jnp.sum(p + t, axis=0, keepdims=True)

    @pl.when(c == nc - 1)
    def _finalize():
        inter = jnp.sum(acc_pt[...], axis=1, keepdims=True)    # (1, 1)
        denom = jnp.sum(acc_ppt[...], axis=1, keepdims=True)   # (1, 1)
        bce_s = jnp.sum(acc_bce[...], axis=1, keepdims=True)   # (1, 1)
        dice = (2.0 * inter + _SMOOTH) / (denom + _SMOOTH)
        bce_ref[...] = jnp.broadcast_to(bce_s, bce_ref.shape).astype(bce_ref.dtype)
        dice_ref[...] = jnp.broadcast_to(dice, dice_ref.shape).astype(dice_ref.dtype)


def _largest_divisor_leq(x, cap):
    cap = max(1, min(x, cap))
    for v in range(cap, 0, -1):
        if x % v == 0:
            return v
    return 1


def _pick_row_tile(rows, max_rows):
    """Largest divisor of `rows` that is <= max_rows and a multiple of 8."""
    cap = max(1, min(rows, max_rows))
    start = cap - (cap % 8)
    for v in range(start, 0, -8):
        if rows % v == 0:
            return v
    return None


def bce_dice_loss(logits, target, *, coef_bce=1.0, coef_dice=1.5,
                  target_block_bytes=1 << 20):
    """Pallas TPU implementation of BCEDiceLoss.forward. Returns a scalar float32."""
    assert logits.shape == target.shape
    n = logits.shape[0]
    d = int(math.prod(logits.shape[1:]))

    # Flattened per-sample layout (row-major => identical element order to .view(N, -1)).
    if d % 128 == 0:
        lanes, rows = 128, d // 128
    elif d % 8 == 0:
        lanes, rows = d // 8, 8
    else:
        lanes, rows = d, 1
    # TODO(synk): samples whose flattened size is not a multiple of 128 fall back to a
    # full-lane block (correct, masked lanes; not lane-optimal).

    x = logits.reshape(n, rows, lanes)
    t = target.reshape(n, rows, lanes)

    itemsize = max(jnp.dtype(logits.dtype).itemsize, jnp.dtype(target.dtype).itemsize)
    max_rows = max(1, int(target_block_bytes) // (lanes * itemsize))

    r_tile = None
    if rows > max_rows:
        r_tile = _pick_row_tile(rows, max_rows)

    if r_tile is not None and r_tile < rows:
        # ---- Chunked mode: one sample per batch block, rows chunked. ----
        nb = n
        nc = rows // r_tile
        block_elems = r_tile * lanes
        kernel = functools.partial(_bce_dice_kernel_chunked, nc=nc)
        grid_spec = pltpu.PrefetchScalarGridSpec(
            num_scalar_prefetch=0,
            grid=(nb, nc),
            in_specs=[
                pl.BlockSpec((None, r_tile, lanes), lambda i, c: (i, c, 0)),
                pl.BlockSpec((None, r_tile, lanes), lambda i, c: (i, c, 0)),
            ],
            out_specs=[
                pl.BlockSpec((1, _OUT_LANES), lambda i, c: (i, 0)),
                pl.BlockSpec((1, _OUT_LANES), lambda i, c: (i, 0)),
            ],
            scratch_shapes=[
                pltpu.VMEM((1, lanes), jnp.float32),   # per-lane BCE partials
                pltpu.VMEM((1, lanes), jnp.float32),   # per-lane sum(p * t)
                pltpu.VMEM((1, lanes), jnp.float32),   # per-lane sum(p + t)
            ],
        )
        dim_sem = ("parallel", "arbitrary")
    else:
        # ---- Packed mode: whole sample(s) per block, fully parallel grid. ----
        b_tile = _largest_divisor_leq(n, max(1, max_rows // rows))
        nb = n // b_tile
        block_elems = b_tile * rows * lanes
        kernel = _bce_dice_kernel_packed
        grid_spec = pltpu.PrefetchScalarGridSpec(
            num_scalar_prefetch=0,
            grid=(nb,),
            in_specs=[
                pl.BlockSpec((b_tile, rows, lanes), lambda i: (i, 0, 0)),
                pl.BlockSpec((b_tile, rows, lanes), lambda i: (i, 0, 0)),
            ],
            out_specs=[
                pl.BlockSpec((1, _OUT_LANES), lambda i: (i, 0)),
                pl.BlockSpec((1, _OUT_LANES), lambda i: (i, 0)),
            ],
        )
        dim_sem = ("parallel",)

    # Scoped-VMEM budget: double-buffered inputs + headroom for f32 temporaries.
    # TODO(synk): pathological shapes (huge samples with no divisible row tiling)
    # may exceed this cap; they fall back to a whole-sample block.
    vmem_est = 2 * 2 * block_elems * itemsize + 10 * block_elems * 4 + (2 << 20)
    vmem_limit = int(min(max(vmem_est, 32 << 20), 48 << 20))

    bce_part, dice_part = pl.pallas_call(
        kernel,
        out_shape=(
            jax.ShapeDtypeStruct((nb, _OUT_LANES), jnp.float32),
            jax.ShapeDtypeStruct((nb, _OUT_LANES), jnp.float32),
        ),
        grid_spec=grid_spec,
        compiler_params=pltpu.CompilerParams(
            dimension_semantics=dim_sem,
            vmem_limit_bytes=vmem_limit,
        ),
    )(x, t)

    # Tiny epilogue in plain JAX (per-block partials -> final scalar).
    bce = jnp.sum(bce_part[:, 0]) / (n * d)
    diceloss = 1.0 - jnp.sum(dice_part[:, 0]) / n
    return coef_bce * bce + coef_dice * diceloss


def _reference(logits, target, coef_bce=1.0, coef_dice=1.5):
    """Pure-JAX reference matching the PyTorch module semantics."""
    x = logits.astype(jnp.float32)
    t = target.astype(jnp.float32)
    bce = jnp.mean(jnp.maximum(x, 0.0) - x * t + jnp.log1p(jnp.exp(-jnp.abs(x))))
    num = x.shape[0]
    p = jax.nn.sigmoid(x).reshape(num, -1)
    tt = t.reshape(num, -1)
    inter = jnp.sum(p * tt, axis=1)
    dice = (2.0 * inter + _SMOOTH) / (jnp.sum(p, axis=1) + jnp.sum(tt, axis=1) + _SMOOTH)
    diceloss = 1.0 - jnp.sum(dice) / num
    return coef_bce * bce + coef_dice * diceloss


if __name__ == "__main__":
    key = jax.random.PRNGKey(0)
    k1, k2 = jax.random.split(key)
    # NCHW, same convention as the PyTorch module; streamed to the kernel as bf16.
    x = jax.random.normal(k1, (2, 4, 16, 16), dtype=jnp.float32).astype(jnp.bfloat16)
    tgt = (jax.random.uniform(k2, (2, 4, 16, 16)) > 0.5).astype(jnp.bfloat16)

    loss = jax.block_until_ready(bce_dice_loss(x, tgt))
    ref = jax.block_until_ready(_reference(x, tgt))

    assert jnp.isfinite(loss), "kernel produced non-finite loss"
    assert abs(float(loss) - float(ref)) < 2e-3, (float(loss), float(ref))
    print("KERNEL_OK")
</pallas_src>

<mosaic_0001>
module attributes {stable_mosaic.version = 11 : i64} {
  func.func @_bce_dice_kernel_packed(%arg0: i32, %arg1: memref<2x8x128xbf16, #tpu.memory_space<vmem>>, %arg2: memref<2x8x128xbf16, #tpu.memory_space<vmem>>, %arg3: memref<1x128xf32, #tpu.memory_space<vmem>>, %arg4: memref<1x128xf32, #tpu.memory_space<vmem>>) attributes {dimension_semantics = [#tpu.dimension_semantics<parallel>], iteration_bounds = array<i64: 1>, scalar_prefetch = 0 : i64, scratch_operands = 0 : i64, tpu.core_type = #tpu.core_type<tc>, window_params = [{transform_indices = @transform_0, window_bounds = array<i64: 2, 8, 128>}, {transform_indices = @transform_1, window_bounds = array<i64: 2, 8, 128>}, {transform_indices = @transform_2, window_bounds = array<i64: 1, 128>}, {transform_indices = @transform_3, window_bounds = array<i64: 1, 128>}]} {
    %c0 = arith.constant 0 : index
    %c0_0 = arith.constant 0 : index
    %c0_1 = arith.constant 0 : index
    %0 = vector.load %arg1[%c0, %c0_0, %c0_1] : memref<2x8x128xbf16, #tpu.memory_space<vmem>>, vector<2x8x128xbf16>
    %1 = arith.extf %0 : vector<2x8x128xbf16> to vector<2x8x128xf32>
    %c0_2 = arith.constant 0 : index
    %c0_3 = arith.constant 0 : index
    %c0_4 = arith.constant 0 : index
    %2 = vector.load %arg2[%c0_2, %c0_3, %c0_4] : memref<2x8x128xbf16, #tpu.memory_space<vmem>>, vector<2x8x128xbf16>
    %3 = arith.extf %2 : vector<2x8x128xbf16> to vector<2x8x128xf32>
    %4 = math.absf %1 : vector<2x8x128xf32>
    %cst = arith.constant 0.000000e+00 : f32
    %5 = vector.broadcast %cst : f32 to vector<2x8x128xf32>
    %6 = arith.subf %5, %4 : vector<2x8x128xf32>
    %7 = math.exp %6 : vector<2x8x128xf32>
    %cst_5 = arith.constant 0.000000e+00 : f32
    %8 = vector.broadcast %cst_5 : f32 to vector<2x8x128xf32>
    %9 = arith.maximumf %1, %8 : vector<2x8x128xf32>
    %10 = arith.mulf %1, %3 : vector<2x8x128xf32>
    %11 = arith.subf %9, %10 : vector<2x8x128xf32>
    %12 = math.log1p %7 : vector<2x8x128xf32>
    %13 = arith.addf %11, %12 : vector<2x8x128xf32>
    %cst_6 = arith.constant 1.000000e+00 : f32
    %14 = vector.broadcast %cst_6 : f32 to vector<2x8x128xf32>
    %15 = arith.addf %14, %7 : vector<2x8x128xf32>
    %16 = tpu.reciprocal %15 {approx = true} : vector<2x8x128xf32> -> vector<2x8x128xf32>
    %cst_7 = arith.constant 0.000000e+00 : f32
    %17 = vector.broadcast %cst_7 : f32 to vector<2x8x128xf32>
    %18 = arith.cmpf oge, %1, %17 : vector<2x8x128xf32>
    %19 = arith.mulf %7, %16 : vector<2x8x128xf32>
    %20 = arith.select %18, %16, %19 : vector<2x8x128xi1>, vector<2x8x128xf32>
    %21 = arith.mulf %20, %3 : vector<2x8x128xf32>
    %cst_8 = arith.constant dense<0.000000e+00> : vector<2x8xf32>
    %22 = vector.multi_reduction <add>, %21, %cst_8 [2] : vector<2x8x128xf32> to vector<2x8xf32>
    %cst_9 = arith.constant dense<0.000000e+00> : vector<2xf32>
    %23 = vector.multi_reduction <add>, %22, %cst_9 [1] : vector<2x8xf32> to vector<2xf32>
    %24 = vector.shape_cast %23 : vector<2xf32> to vector<2x1xf32>
    %25 = arith.addf %20, %3 : vector<2x8x128xf32>
    %cst_10 = arith.constant dense<0.000000e+00> : vector<2x8xf32>
    %26 = vector.multi_reduction <add>, %25, %cst_10 [2] : vector<2x8x128xf32> to vector<2x8xf32>
    %cst_11 = arith.constant dense<0.000000e+00> : vector<2xf32>
    %27 = vector.multi_reduction <add>, %26, %cst_11 [1] : vector<2x8xf32> to vector<2xf32>
    %28 = vector.shape_cast %27 : vector<2xf32> to vector<2x1xf32>
    %cst_12 = arith.constant dense<0.000000e+00> : vector<2x8xf32>
    %29 = vector.multi_reduction <add>, %13, %cst_12 [2] : vector<2x8x128xf32> to vector<2x8xf32>
    %cst_13 = arith.constant dense<0.000000e+00> : vector<2xf32>
    %30 = vector.multi_reduction <add>, %29, %cst_13 [1] : vector<2x8xf32> to vector<2xf32>
    %31 = vector.shape_cast %30 : vector<2xf32> to vector<2x1xf32>
    %cst_14 = arith.constant 2.000000e+00 : f32
    %32 = vector.broadcast %cst_14 : f32 to vector<2x1xf32>
    %33 = arith.mulf %32, %24 : vector<2x1xf32>
    %cst_15 = arith.constant 9.99999974E-6 : f32
    %34 = vector.broadcast %cst_15 : f32 to vector<2x1xf32>
    %35 = arith.addf %33, %34 : vector<2x1xf32>
    %cst_16 = arith.constant 9.99999974E-6 : f32
    %36 = vector.broadcast %cst_16 : f32 to vector<2x1xf32>
    %37 = arith.addf %28, %36 : vector<2x1xf32>
    %38 = arith.divf %35, %37 : vector<2x1xf32>
    %cst_17 = arith.constant dense<0.000000e+00> : vector<1xf32>
    %39 = vector.multi_reduction <add>, %31, %cst_17 [0] : vector<2x1xf32> to vector<1xf32>
    %40 = vector.shape_cast %39 : vector<1xf32> to vector<1x1xf32>
    %cst_18 = arith.constant dense<0.000000e+00> : vector<1xf32>
    %41 = vector.multi_reduction <add>, %38, %cst_18 [0] : vector<2x1xf32> to vector<1xf32>
    %42 = vector.shape_cast %41 : vector<1xf32> to vector<1x1xf32>
    %43 = vector.shape_cast %40 : vector<1x1xf32> to vector<1x1xf32>
    %44 = vector.broadcast %43 : vector<1x1xf32> to vector<1x128xf32>
    %c0_19 = arith.constant 0 : index
    %c0_20 = arith.constant 0 : index
    %45 = vector.load %arg3[%c0_19, %c0_20] : memref<1x128xf32, #tpu.memory_space<vmem>>, vector<1x128xf32>
    tpu.vector_store %arg3[%c0_19, %c0_20], %44 {strides = array<i32>} : memref<1x128xf32, #tpu.memory_space<vmem>>, vector<1x128xf32>,
    %46 = vector.shape_cast %42 : vector<1x1xf32> to vector<1x1xf32>
    %47 = vector.broadcast %46 : vector<1x1xf32> to vector<1x128xf32>
    %c0_21 = arith.constant 0 : index
    %c0_22 = arith.constant 0 : index
    %48 = vector.load %arg4[%c0_21, %c0_22] : memref<1x128xf32, #tpu.memory_space<vmem>>, vector<1x128xf32>
    tpu.vector_store %arg4[%c0_21, %c0_22], %47 {strides = array<i32>} : memref<1x128xf32, #tpu.memory_space<vmem>>, vector<1x128xf32>,
    return
  }
  func.func @transform_0(%arg0: i32) -> (i32, i32, i32) {
    %c0_i32 = arith.constant 0 : i32
    %c0_i32_0 = arith.constant 0 : i32
    %c0_i32_1 = arith.constant 0 : i32
    return %arg0, %c0_i32, %c0_i32_0 : i32, i32, i32
  }
  func.func @transform_1(%arg0: i32) -> (i32, i32, i32) {
    %c0_i32 = arith.constant 0 : i32
    %c0_i32_0 = arith.constant 0 : i32
    %c0_i32_1 = arith.constant 0 : i32
    return %arg0, %c0_i32, %c0_i32_0 : i32, i32, i32
  }
  func.func @transform_2(%arg0: i32) -> (i32, i32) {
    %c0_i32 = arith.constant 0 : i32
    %c0_i32_0 = arith.constant 0 : i32
    return %arg0, %c0_i32 : i32, i32
  }
  func.func @transform_3(%arg0: i32) -> (i32, i32) {
    %c0_i32 = arith.constant 0 : i32
    %c0_i32_0 = arith.constant 0 : i32
    return %arg0, %c0_i32 : i32, i32
  }
}

</mosaic_0001>

<llo_original>
// kernel: tpu_custom_call.1
$region0: #{tpu_custom_call.1}
  #allocation0 [shape = 'u32[]', space=smem, size = 0x4, offset = 0x4, fixed_abs, tag = 'smem constant byte address 0x4 - core index']
  #allocation1 [shape = 'u32[144,128]{1,0:T(1,128)}', space=vmem, size = 0x12000, scoped, tag = 'internal scratch']
  %s0 = inlined_call_operand.hbm [shape: bf16[2,8,128], index: 0, kind: input, shape index: {}]
  %s1 = inlined_call_operand.hbm [shape: bf16[2,8,128], index: 1, kind: input, shape index: {}]
  %s2 = inlined_call_operand.hbm [shape: f32[1,128], index: 2, kind: output, shape index: {0}]
  %s3 = inlined_call_operand.hbm [shape: f32[1,128], index: 3, kind: output, shape index: {1}]
  %4 = xla_tuple %s2, %s3
  %s5 = sld [smem:[#allocation0]]
  $region34: #{tpu_custom_call.1} parent=0
    _
  %s7 = ssub.s32 1, %s5
  %s8 = scalar_select 0, %s7, %s5
  $region1: #{tpu_custom_call.1} parent=0
    #allocation2 [shape = 'u8[4096]{0}', space=vmem, size = 0x1000, scoped, tag = 'input window, operand 0, single buffered']
    #allocation3 [shape = 's32[1]{0}', space=sflag, size = 0x4, scoped, tag = 'scoped memory for tpu_custom_call.1']
    #allocation4 [shape = 's32[1]{0}', space=sflag, size = 0x4, scoped, tag = 'scoped memory for tpu_custom_call.1']
    #allocation5 [shape = 'u8[4096]{0}', space=vmem, size = 0x1000, scoped, tag = 'input window, operand 1, single buffered']
    #allocation6 [shape = 's32[1]{0}', space=sflag, size = 0x4, scoped, tag = 'scoped memory for tpu_custom_call.1']
    #allocation7 [shape = 'u8[512]{0}', space=vmem, size = 0x400, scoped, tag = 'output window, operand 0, single buffered']
    #allocation8 [shape = 'u8[512]{0}', space=vmem, size = 0x400, scoped, tag = 'output window, operand 1, single buffered']
    #allocation9 [shape = 's32[1]{0}', space=sflag, size = 0x4, scoped, tag = 'scoped memory for tpu_custom_call.1']
    %9 = vsyncpa [#allocation3], 0
    %10 = vsyncpa [#allocation6], 0
    %11 = vsyncpa [#allocation4], 0
    %12 = vsyncpa [#allocation9], 0
    // Predicated region
    $region2: #{tpu_custom_call.1} parent=1 // pred_check
      _
    $region3: #{tpu_custom_call.1} parent=1 // pred_check_branch
      %14 = sbr.rel (0) target = $region5
    $region4: #{tpu_custom_call.1} parent=1 // pred_region
      %s16 = ssub.s32 128, 128
      %17 = vsyncadd [#allocation3], %s16
      %s18 = sshll.u32 [#allocation2], 4
      %s19 = int_to_ptr.vmem [resolvable:$true] %s18
      %24 = dma.hbm_to_vmem [thread:$0]  %s0, 128, %s19, [#allocation3], 64, 64, 4
    $region5: #{tpu_custom_call.1} parent=1 // pred_fallthru
      _
    // Predicated region
    $region6: #{tpu_custom_call.1} parent=1 // pred_check
      _
    $region7: #{tpu_custom_call.1} parent=1 // pred_check_branch
      %26 = sbr.rel (0) target = $region9
    $region8: #{tpu_custom_call.1} parent=1 // pred_region
      %s28 = ssub.s32 128, 128
      %29 = vsyncadd [#allocation6], %s28
      %s30 = sshll.u32 [#allocation5], 4
      %s31 = int_to_ptr.vmem [resolvable:$true] %s30
      %36 = dma.hbm_to_vmem [thread:$0]  %s1, 128, %s31, [#allocation6], 64, 64, 4
    $region9: #{tpu_custom_call.1} parent=1 // pred_fallthru
      _
    // Predicated region
    $region10: #{tpu_custom_call.1} parent=1 // pred_check
      _
    $region11: #{tpu_custom_call.1} parent=1 // pred_check_branch
      %38 = sbr.rel (0) target = $region13
    $region12: #{tpu_custom_call.1} parent=1 // pred_region
      %39 = dma.done [#allocation3], 128
    $region13: #{tpu_custom_call.1} parent=1 // pred_fallthru
      _
    // Predicated region
    $region14: #{tpu_custom_call.1} parent=1 // pred_check
      _
    $region15: #{tpu_custom_call.1} parent=1 // pred_check_branch
      %41 = sbr.rel (0) target = $region17
    $region16: #{tpu_custom_call.1} parent=1 // pred_region
      %42 = dma.done [#allocation6], 128
    $region17: #{tpu_custom_call.1} parent=1 // pred_fallthru
      _
    %v43 = vld [vmem:[#allocation2] sm:$0xf]
    %v44 = vld [vmem:[#allocation2 + $0x4] sm:$0xf]
    %v45 = vunpack.c.l.bf16 %v43
    %v46 = vunpack.c.l.bf16 %v44
    %v47 = vld [vmem:[#allocation5] sm:$0xf]
    %v48 = vld [vmem:[#allocation5 + $0x4] sm:$0xf]
    %v49 = vunpack.c.l.bf16 %v47
    %v50 = vunpack.c.l.bf16 %v48
    %v51 = vand.u32 2147483647, %v45
    %v52 = vand.u32 2147483647, %v46
    %v53 = vsub.f32 0.0, %v51
    %v54 = vsub.f32 0.0, %v52
    %v55 = vmul.f32 %v53, 1.442695
    %v56 = vpow.pop %v55
    %v57 = vmul.f32 %v54, 1.442695
    %v58 = vpow.pop %v57
    %v59 = vmax.f32 %v45, 0.0
    %v60 = vmax.f32 %v46, 0.0
    %v61 = vmul.f32 %v45, %v49
    %v62 = vmul.f32 %v46, %v50
    %v63 = vsub.f32 %v59, %v61
    %v64 = vsub.f32 %v60, %v62
    %v65 = vadd.f32 %v56, 1.0
    %v66 = vlog2.pop %v65
    %v67 = vmul.f32 %v66, 0.6931472
    %v68 = vmul.f32 -0.5, %v56
    %v69 = vadd.f32 %v68, 1.0
    %v70 = vmul.f32 %v69, %v56
    %v71 = vand.u32 2147483647, %v56
    %vm72 = vcmp.lt.f32.partialorder %v71, 0.0004427343
    %v73 = vsel %vm72, %v70, %v67
    %v74 = vadd.f32 %v58, 1.0
    %v75 = vlog2.pop %v74
    %v76 = vmul.f32 %v75, 0.6931472
    %v77 = vmul.f32 -0.5, %v58
    %v78 = vadd.f32 %v77, 1.0
    %v79 = vmul.f32 %v78, %v58
    %v80 = vand.u32 2147483647, %v58
    %vm81 = vcmp.lt.f32.partialorder %v80, 0.0004427343
    %v82 = vsel %vm81, %v79, %v76
    %v83 = vadd.f32 %v63, %v73
    %v84 = vadd.f32 %v64, %v82
    %v85 = vadd.f32 %v56, 1.0
    %v86 = vadd.f32 %v58, 1.0
    %v87 = vrcp.pop %v85
    %v88 = vrcp.pop %v86
    %vm89 = vcmp.ge.f32.partialorder %v45, 0.0
    %vm90 = vcmp.ge.f32.partialorder %v46, 0.0
    %v91 = vmul.f32 %v56, %v87
    %v92 = vmul.f32 %v58, %v88
    %v93 = vsel %vm89, %v87, %v91
    %v94 = vsel %vm90, %v88, %v92
    %v95 = vmul.f32 %v93, %v49
    %v96 = vmul.f32 %v94, %v50
    %97 = vadd.xlane.f32.xlu0 %v95
    %v98 = vpop.xlane.xlu0 %97
    %99 = vadd.xlane.f32.xlu0 %v96
    %v100 = vpop.xlane.xlu0 %99
    %v103 = vlaneseq
    %v104 = vand.u32 %v103, 127
    %v105 = vlaneseq
    %v106 = vshrl.u32 %v105, 7
    %v107 = vsub.s32 %v104, %v106
    %v108 = vrot.slane %v98, %v107
    %v109 = vlaneseq
    %v110 = vshrl.u32 %v109, 7
    %v111 = vsub.s32 %v104, %v110
    %v112 = vrot.slane %v100, %v111
    %vm113 = vcmask 1041409
    %v114 = vsel %vm113, %v112, %v108
    %vm116 = vcmask 58368
    %v117 = vsel %vm116, %v114, 0.0
    %118 = vadd.xlane.f32.xlu0 %v117
    %v119 = vpop.xlane.xlu0 %118
    %v120 = vadd.f32 %v93, %v49
    %v121 = vadd.f32 %v94, %v50
    %122 = vadd.xlane.f32.xlu0 %v120
    %v123 = vpop.xlane.xlu0 %122
    %124 = vadd.xlane.f32.xlu0 %v121
    %v125 = vpop.xlane.xlu0 %124
    %v128 = vlaneseq
    %v129 = vshrl.u32 %v128, 7
    %v130 = vsub.s32 %v104, %v129
    %v131 = vrot.slane %v123, %v130
    %v132 = vlaneseq
    %v133 = vshrl.u32 %v132, 7
    %v134 = vsub.s32 %v104, %v133
    %v135 = vrot.slane %v125, %v134
    %v136 = vsel %vm113, %v135, %v131
    %v138 = vsel %vm116, %v136, 0.0
    %139 = vadd.xlane.f32.xlu0 %v138
    %v140 = vpop.xlane.xlu0 %139
    %141 = vadd.xlane.f32.xlu0 %v83
    %v142 = vpop.xlane.xlu0 %141
    %143 = vadd.xlane.f32.xlu0 %v84
    %v144 = vpop.xlane.xlu0 %143
    %v147 = vlaneseq
    %v148 = vshrl.u32 %v147, 7
    %v149 = vsub.s32 %v104, %v148
    %v150 = vrot.slane %v142, %v149
    %v151 = vlaneseq
    %v152 = vshrl.u32 %v151, 7
    %v153 = vsub.s32 %v104, %v152
    %v154 = vrot.slane %v144, %v153
    %v155 = vsel %vm113, %v154, %v150
    %v157 = vsel %vm116, %v155, 0.0
    %158 = vadd.xlane.f32.xlu0 %v157
    %v159 = vpop.xlane.xlu0 %158
    %v160 = vmul.f32 %v119, 2.0
    %v161 = vadd.f32 %v160, 1e-05
    %v162 = vadd.f32 %v140, 1e-05
    %v163 = vrcp.pop %v162
    %v164 = vmul.f32 %v161, %v163
    %vm165 = vcmask 1041408
    %v166 = vsel %vm165, %v159, 0.0
    %v167 = vrot.slane %v166, 4
    %v168 = vadd.f32 %v166, %v167
    %v169 = vrot.slane %v168, 2
    %v170 = vadd.f32 %v168, %v169
    %v171 = vrot.slane %v170, 1
    %v172 = vadd.f32 %v170, %v171
    %v173 = vsel %vm165, %v164, 0.0
    %v174 = vrot.slane %v173, 4
    %v175 = vadd.f32 %v173, %v174
    %v176 = vrot.slane %v175, 2
    %v177 = vadd.f32 %v175, %v176
    %v178 = vrot.slane %v177, 1
    %v179 = vadd.f32 %v177, %v178
    %180 = vst [vmem:[#allocation7] sm:$0x1] %v172
    %181 = vst [vmem:[#allocation8] sm:$0x1] %v179
    // Predicated region
    $region18: #{tpu_custom_call.1} parent=1 // pred_check
      _
    $region19: #{tpu_custom_call.1} parent=1 // pred_check_branch
      %183 = sbr.rel (0) target = $region21
    $region20: #{tpu_custom_call.1} parent=1 // pred_region
      %s185 = ssub.s32 16, 16
      %186 = vsyncadd [#allocation4], %s185
      %s188 = sshll.u32 [#allocation7], 4
      %s189 = int_to_ptr.vmem [resolvable:$true] %s188
      %191 = dma.vmem_to_hbm [thread:$0]  %s189, 16, %s2, [#allocation4]
    $region21: #{tpu_custom_call.1} parent=1 // pred_fallthru
      _
    // Predicated region
    $region22: #{tpu_custom_call.1} parent=1 // pred_check
      _
    $region23: #{tpu_custom_call.1} parent=1 // pred_check_branch
      %193 = sbr.rel (0) target = $region25
    $region24: #{tpu_custom_call.1} parent=1 // pred_region
      %s195 = ssub.s32 16, 16
      %196 = vsyncadd [#allocation9], %s195
      %s198 = sshll.u32 [#allocation8], 4
      %s199 = int_to_ptr.vmem [resolvable:$true] %s198
      %201 = dma.vmem_to_hbm [thread:$0]  %s199, 16, %s3, [#allocation9]
    $region25: #{tpu_custom_call.1} parent=1 // pred_fallthru
      _
    // Predicated region
    $region26: #{tpu_custom_call.1} parent=1 // pred_check
      _
    $region27: #{tpu_custom_call.1} parent=1 // pred_check_branch
      %203 = sbr.rel (0) target = $region29
    $region28: #{tpu_custom_call.1} parent=1 // pred_region
      %204 = dma.done [#allocation4], 16
    $region29: #{tpu_custom_call.1} parent=1 // pred_fallthru
      _
    // Predicated region
    $region30: #{tpu_custom_call.1} parent=1 // pred_check
      _
    $region31: #{tpu_custom_call.1} parent=1 // pred_check_branch
      %206 = sbr.rel (0) target = $region33
    $region32: #{tpu_custom_call.1} parent=1 // pred_region
      %207 = dma.done [#allocation9], 16
    $region33: #{tpu_custom_call.1} parent=1 // pred_fallthru
      _
    %208 = vsyncpa [#allocation3], 1
    %209 = vsyncpa [#allocation6], 1
    %210 = vsyncpa [#allocation4], 1
    %211 = vsyncpa [#allocation9], 1

</llo_original>
